<compile_context>
chip_gen: v5e
topology: v5e:2x2
jax: 0.10.0
libtpu: 0.0.40
codegen_flags: <defaults>
</compile_context>

<pallas_src>
import functools
import math

import jax
import jax.numpy as jnp
import numpy as np
from jax import lax
from jax.experimental import pallas as pl
from jax.experimental.pallas import tpu as pltpu


# ------------------------------ helpers --------------------------------------
def _pick_tile(n, target=256):
    """Largest tile <= target that divides n (falls back to the full dim)."""
    for t in (target, 128, 64, 32, 16, 8):
        if n >= t and n % t == 0:
            return t
    return n


def _nbytes(shape, dtype):
    return int(np.prod(shape)) * jnp.dtype(dtype).itemsize


def _vmem_limit(block_list, scratch_bytes=0):
    """Explicit scoped-VMEM budget: double-buffered blocks + scratch + headroom."""
    blocks = sum(_nbytes(s, d) for s, d in block_list)
    est = int(2 * blocks * 1.25) + int(scratch_bytes) + (4 << 20)
    return int(max(16 << 20, min(est, 64 << 20)))


def _layernorm_f32(h, w, b, eps=1e-5):
    mu = jnp.mean(h, axis=-1, keepdims=True)
    var = jnp.mean((h - mu) ** 2, axis=-1, keepdims=True)
    return (h - mu) * lax.rsqrt(var + eps) * w + b


# -------------------------- phase 1: LN1 + QKV --------------------------------
def _ln_qkv_kernel(x_ref, g_ref, b_ref, w_ref, bias_ref,
                   q_ref, k_ref, v_ref, *, compute_dtype):
    x = x_ref[...].astype(jnp.float32)                       # (tr, C)
    C = x.shape[-1]
    h = _layernorm_f32(x, g_ref[0], b_ref[0]).astype(compute_dtype)
    qkv = jnp.dot(h, w_ref[...],
                  preferred_element_type=jnp.float32) + bias_ref[0]   # (tr, 3C) f32
    q_ref[...] = qkv[:, 0 * C:1 * C].astype(q_ref.dtype)
    k_ref[...] = qkv[:, 1 * C:2 * C].astype(k_ref.dtype)
    v_ref[...] = qkv[:, 2 * C:3 * C].astype(v_ref.dtype)


# --------- phase 2: flash attention + output projection + residual ------------
def _flash_attn_kernel(x_ref, q_ref, k_ref, v_ref, wproj_ref, bproj_ref,
                       o_ref, m_scr, l_scr, acc_scr,
                       *, n_head, compute_dtype):
    qi = pl.program_id(1)
    ki = pl.program_id(2)
    nk = pl.num_programs(2)

    tq, C = q_ref.shape[1], q_ref.shape[2]
    tk = k_ref.shape[1]
    hd = C // n_head
    scale = 1.0 / math.sqrt(hd)
    neg_big = jnp.float32(-1e30)
    approx = jnp.dtype(compute_dtype) != jnp.dtype(jnp.float32)

    # ---- init the online-softmax state at the first kv tile -----------------
    @pl.when(ki == 0)
    def _init():
        m_scr[...] = jnp.full(m_scr.shape, neg_big, jnp.float32)
        l_scr[...] = jnp.zeros(l_scr.shape, jnp.float32)
        acc_scr[...] = jnp.zeros(acc_scr.shape, jnp.float32)

    q_start = qi * tq
    k_start = ki * tk

    # ---- accumulate; skip kv tiles entirely in the causal future ------------
    # (their HBM blocks are never fetched either: the wrapper's index_map
    #  clamps the kv block index, so the pipeline re-uses the previous block.)
    @pl.when(k_start <= q_start + (tq - 1))
    def _accumulate():
        qt = q_ref[0]                                         # (tq, C) compute dtype
        kt = k_ref[0]                                         # (tk, C)
        vt = v_ref[0]                                         # (tk, C)

        # per-tile causal mask via index arithmetic (computed once per tile)
        row = q_start + lax.broadcasted_iota(jnp.int32, (tq, tk), 0)
        col = k_start + lax.broadcasted_iota(jnp.int32, (tq, tk), 1)
        causal = col <= row                                   # (tq, tk)

        # static unroll over heads: lane slices, no head-axis transposes
        for h in range(n_head):
            sl = slice(h * hd, (h + 1) * hd)
            s = lax.dot_general(qt[:, sl], kt[:, sl],
                                (((1,), (1,)), ((), ())),
                                preferred_element_type=jnp.float32) * scale
            s = jnp.where(causal, s, neg_big)                 # (tq, tk) f32

            m_prev = m_scr[h]                                 # (tq, 1)
            m_new = jnp.maximum(m_prev, jnp.max(s, axis=-1, keepdims=True))
            alpha = jnp.exp(m_prev - m_new)
            p = jnp.exp(s - m_new)                            # (tq, tk) f32
            l_scr[h] = alpha * l_scr[h] + jnp.sum(p, axis=-1, keepdims=True)
            acc_scr[h] = alpha * acc_scr[h] + jnp.dot(
                p.astype(compute_dtype), vt[:, sl],
                preferred_element_type=jnp.float32)
            m_scr[h] = m_new

    # ---- finalize: normalize, per-head output projection, residual add ------
    @pl.when(ki == nk - 1)
    def _finalize():
        x = x_ref[0].astype(jnp.float32)                      # (tq, C)
        inv_l = pl.reciprocal(l_scr[...], approx=approx)      # (nh, tq, 1)
        y = acc_scr[...] * inv_l                              # (nh, tq, hd) f32
        attn = jnp.zeros((tq, C), jnp.float32)
        for h in range(n_head):
            attn = attn + jnp.dot(y[h].astype(compute_dtype),
                                  wproj_ref[h * hd:(h + 1) * hd, :],
                                  preferred_element_type=jnp.float32)
        attn = attn + bproj_ref[0]
        # TODO(synk): attn_dropout / resid_dropout (p=0.05) are identity in eval
        # mode; training-mode dropout would use pltpu.prng_seed/prng_random_bits.
        o_ref[0] = (x + attn).astype(o_ref.dtype)


# ------------------- phase 3: LN2 + MLP (GELU-tanh) + residual ----------------
def _ln_mlp_kernel(x_ref, g_ref, b_ref, wfc_ref, bfc_ref, wproj_ref, bproj_ref,
                   o_ref, *, compute_dtype):
    x = x_ref[...].astype(jnp.float32)                        # (tr, C)
    h = _layernorm_f32(x, g_ref[0], b_ref[0]).astype(compute_dtype)
    hfc = jnp.dot(h, wfc_ref[...],
                  preferred_element_type=jnp.float32) + bfc_ref[0]    # (tr, 4C) f32
    c0 = math.sqrt(2.0 / math.pi)                             # GELU tanh approximation
    hfc = 0.5 * hfc * (1.0 + jnp.tanh(c0 * (hfc + 0.044715 * (hfc * hfc * hfc))))
    out = jnp.dot(hfc.astype(compute_dtype), wproj_ref[...],
                  preferred_element_type=jnp.float32) + bproj_ref[0]
    o_ref[...] = (x + out).astype(o_ref.dtype)


# --------------------------------- wrapper ------------------------------------
def block_forward(x, params, n_head, compute_dtype=jnp.bfloat16):
    B, T, C = x.shape
    assert C % n_head == 0
    hd = C // n_head
    cdt = compute_dtype
    f32 = jnp.float32

    # MXU operands in compute dtype (bf16 by default); LN params, biases,
    # residual stream and accumulations stay f32.
    w_qkv = params['w_qkv'].astype(cdt)
    w_attn_proj = params['w_attn_proj'].astype(cdt)
    w_fc = params['w_fc'].astype(cdt)
    w_mlp_proj = params['w_mlp_proj'].astype(cdt)

    R = B * T                       # flatten (B, T) rows for the LN+GEMM phases
    tr = _pick_tile(R)              # row tile
    tq = _pick_tile(T)              # query tile
    tk = _pick_tile(T)              # key/value tile
    x2d = x.reshape(R, C)

    # ---------------- phase 1: LN1 + fused QKV projection --------------------
    p1_blocks = ([((tr, C), x.dtype), ((1, C), f32), ((1, C), f32),
                  ((C, 3 * C), cdt), ((1, 3 * C), f32)]
                 + [((tr, C), cdt)] * 3)
    q2, k2, v2 = pl.pallas_call(
        functools.partial(_ln_qkv_kernel, compute_dtype=cdt),
        out_shape=[jax.ShapeDtypeStruct((R, C), cdt)] * 3,
        grid=(R // tr,),
        in_specs=[
            pl.BlockSpec((tr, C), lambda r: (r, 0)),          # x rows
            pl.BlockSpec((1, C), lambda r: (0, 0)),           # ln1_w
            pl.BlockSpec((1, C), lambda r: (0, 0)),           # ln1_b
            pl.BlockSpec((C, 3 * C), lambda r: (0, 0)),       # w_qkv
            pl.BlockSpec((1, 3 * C), lambda r: (0, 0)),       # b_qkv
        ],
        out_specs=[pl.BlockSpec((tr, C), lambda r: (r, 0))] * 3,
        compiler_params=pltpu.CompilerParams(
            dimension_semantics=("parallel",),
            vmem_limit_bytes=_vmem_limit(p1_blocks)),
    )(x2d, params['ln1_w'], params['ln1_b'], w_qkv, params['b_qkv'])
    q = q2.reshape(B, T, C)
    k = k2.reshape(B, T, C)
    v = v2.reshape(B, T, C)

    # ------ phase 2: flash attention + output projection + residual ----------
    # kv index_map clamps the block index to the last causally-needed kv tile:
    # skipped (future) iterations keep the same block index, so the Pallas
    # pipeline elides their HBM->VMEM DMAs entirely.
    def _kv_map(b, qi, ki):
        k_last = (qi * tq + (tq - 1)) // tk
        return (b, jnp.minimum(ki, k_last), 0)

    p2_blocks = [((1, tq, C), x.dtype), ((1, tq, C), cdt), ((1, tk, C), cdt),
                 ((1, tk, C), cdt), ((C, C), cdt), ((1, C), f32),
                 ((1, tq, C), f32)]
    p2_scratch = 4 * n_head * tq * (128 + 128 + max(hd, 128))  # lane-padded f32
    x_attn = pl.pallas_call(
        functools.partial(_flash_attn_kernel, n_head=n_head, compute_dtype=cdt),
        out_shape=jax.ShapeDtypeStruct((B, T, C), f32),
        grid=(B, T // tq, T // tk),
        in_specs=[
            pl.BlockSpec((1, tq, C), lambda b, qi, ki: (b, qi, 0)),  # residual x
            pl.BlockSpec((1, tq, C), lambda b, qi, ki: (b, qi, 0)),  # q
            pl.BlockSpec((1, tk, C), _kv_map),                       # k (clamped)
            pl.BlockSpec((1, tk, C), _kv_map),                       # v (clamped)
            pl.BlockSpec((C, C), lambda b, qi, ki: (0, 0)),          # w_attn_proj
            pl.BlockSpec((1, C), lambda b, qi, ki: (0, 0)),          # b_attn_proj
        ],
        out_specs=pl.BlockSpec((1, tq, C), lambda b, qi, ki: (b, qi, 0)),
        scratch_shapes=[
            pltpu.VMEM((n_head, tq, 1), jnp.float32),    # running max m
            pltpu.VMEM((n_head, tq, 1), jnp.float32),    # running denom l
            pltpu.VMEM((n_head, tq, hd), jnp.float32),   # running numerator acc
        ],
        compiler_params=pltpu.CompilerParams(
            dimension_semantics=("parallel", "parallel", "arbitrary"),
            vmem_limit_bytes=_vmem_limit(p2_blocks, p2_scratch)),
    )(x, q, k, v, w_attn_proj, params['b_attn_proj'])

    # ---------------- phase 3: LN2 + MLP + residual ---------------------------
    p3_blocks = [((tr, C), f32), ((1, C), f32), ((1, C), f32),
                 ((C, 4 * C), cdt), ((1, 4 * C), f32),
                 ((4 * C, C), cdt), ((1, C), f32), ((tr, C), f32)]
    out2d = pl.pallas_call(
        functools.partial(_ln_mlp_kernel, compute_dtype=cdt),
        out_shape=jax.ShapeDtypeStruct((R, C), x.dtype),
        grid=(R // tr,),
        in_specs=[
            pl.BlockSpec((tr, C), lambda r: (r, 0)),          # x after attention
            pl.BlockSpec((1, C), lambda r: (0, 0)),           # ln2_w
            pl.BlockSpec((1, C), lambda r: (0, 0)),           # ln2_b
            pl.BlockSpec((C, 4 * C), lambda r: (0, 0)),       # w_fc
            pl.BlockSpec((1, 4 * C), lambda r: (0, 0)),       # b_fc
            pl.BlockSpec((4 * C, C), lambda r: (0, 0)),       # w_mlp_proj
            pl.BlockSpec((1, C), lambda r: (0, 0)),           # b_mlp_proj
        ],
        out_specs=pl.BlockSpec((tr, C), lambda r: (r, 0)),
        compiler_params=pltpu.CompilerParams(
            dimension_semantics=("parallel",),
            vmem_limit_bytes=_vmem_limit(p3_blocks)),
    )(x_attn.reshape(R, C), params['ln2_w'], params['ln2_b'],
      w_fc, params['b_fc'], w_mlp_proj, params['b_mlp_proj'])
    return out2d.reshape(B, T, C)


# ------------------------- pure-JAX reference (check) -------------------------
def block_reference(x, params, n_head):
    B, T, C = x.shape
    hd = C // n_head
    hp = jax.lax.Precision.HIGHEST
    mm = functools.partial(jnp.matmul, precision=hp)

    def ln(h, w, b):
        mu = jnp.mean(h, axis=-1, keepdims=True)
        var = jnp.mean((h - mu) ** 2, axis=-1, keepdims=True)
        return (h - mu) / jnp.sqrt(var + 1e-5) * w + b

    h1 = ln(x, params['ln1_w'][0], params['ln1_b'][0])
    qkv = mm(h1, params['w_qkv']) + params['b_qkv'][0]
    q, k, v = jnp.split(qkv, 3, axis=-1)
    q = q.reshape(B, T, n_head, hd).transpose(0, 2, 1, 3)
    k = k.reshape(B, T, n_head, hd).transpose(0, 2, 1, 3)
    v = v.reshape(B, T, n_head, hd).transpose(0, 2, 1, 3)
    s = jnp.einsum('bhtd,bhsd->bhts', q, k, precision=hp) / math.sqrt(hd)
    mask = jnp.tril(jnp.ones((T, T), dtype=bool))
    s = jnp.where(mask[None, None], s, -jnp.inf)
    p = jax.nn.softmax(s, axis=-1)
    y = jnp.einsum('bhts,bhsd->bhtd', p, v, precision=hp)
    y = y.transpose(0, 2, 1, 3).reshape(B, T, C)
    x = x + (mm(y, params['w_attn_proj']) + params['b_attn_proj'][0])

    h2 = ln(x, params['ln2_w'][0], params['ln2_b'][0])
    hfc = mm(h2, params['w_fc']) + params['b_fc'][0]
    hfc = 0.5 * hfc * (1.0 + jnp.tanh(math.sqrt(2.0 / math.pi)
                                      * (hfc + 0.044715 * hfc ** 3)))
    x = x + (mm(hfc, params['w_mlp_proj']) + params['b_mlp_proj'][0])
    return x


# ----------------------------------- main --------------------------------------
if __name__ == "__main__":
    def make_params(key, C):
        ks = jax.random.split(key, 12)

        def w(k, shape, scale=0.02):
            return (scale * jax.random.normal(k, shape)).astype(jnp.float32)

        return {
            # LayerNorm params stored (1, C) so they are 2-D for VMEM tiling
            'ln1_w': (1.0 + w(ks[0], (1, C))).astype(jnp.float32),
            'ln1_b': w(ks[1], (1, C)),
            'ln2_w': (1.0 + w(ks[2], (1, C))).astype(jnp.float32),
            'ln2_b': w(ks[3], (1, C)),
            # attention: c_attn (C -> 3C), c_proj (C -> C)
            'w_qkv': w(ks[4], (C, 3 * C)),
            'b_qkv': w(ks[5], (1, 3 * C), 0.01),
            'w_attn_proj': w(ks[6], (C, C)),
            'b_attn_proj': w(ks[7], (1, C), 0.01),
            # MLP: c_fc (C -> 4C), c_proj (4C -> C)
            'w_fc': w(ks[8], (C, 4 * C)),
            'b_fc': w(ks[9], (1, 4 * C), 0.01),
            'w_mlp_proj': w(ks[10], (4 * C, C)),
            'b_mlp_proj': w(ks[11], (1, C), 0.01),
        }

    configs = [
        # (B, T, C, n_head, compute_dtype, tol)
        (2, 8, 32, 4, jnp.float32, 1e-3),     # tiny spec shape, full-precision path
        (2, 8, 32, 4, jnp.bfloat16, 2e-2),    # tiny spec shape, bf16-MXU path
        (2, 512, 128, 4, jnp.float32, 1e-3),  # multi-tile flash / causal-skip path
    ]

    for (B, T, C, nh, cdt, tol) in configs:
        root = jax.random.PRNGKey(0)
        kx, kp = jax.random.split(root)
        params = make_params(kp, C)
        x = jax.random.normal(kx, (B, T, C), dtype=jnp.float32)

        out = jax.block_until_ready(block_forward(x, params, nh, compute_dtype=cdt))
        ref = jax.block_until_ready(block_reference(x, params, nh))
        np.testing.assert_allclose(np.asarray(out), np.asarray(ref),
                                   rtol=tol, atol=tol)

    print("KERNEL_OK")
</pallas_src>

<mosaic_0001>
module attributes {stable_mosaic.version = 11 : i64} {
  func.func @_ln_qkv_kernel(%arg0: i32, %arg1: memref<16x32xf32, #tpu.memory_space<vmem>>, %arg2: memref<1x32xf32, #tpu.memory_space<vmem>>, %arg3: memref<1x32xf32, #tpu.memory_space<vmem>>, %arg4: memref<32x96xf32, #tpu.memory_space<vmem>>, %arg5: memref<1x96xf32, #tpu.memory_space<vmem>>, %arg6: memref<16x32xf32, #tpu.memory_space<vmem>>, %arg7: memref<16x32xf32, #tpu.memory_space<vmem>>, %arg8: memref<16x32xf32, #tpu.memory_space<vmem>>) attributes {dimension_semantics = [#tpu.dimension_semantics<parallel>], iteration_bounds = array<i64: 1>, scalar_prefetch = 0 : i64, scratch_operands = 0 : i64, tpu.core_type = #tpu.core_type<tc>, window_params = [{transform_indices = @transform_0, window_bounds = array<i64: 16, 32>}, {pipeline_mode = #tpu.pipeline_mode<synchronous>, transform_indices = @transform_1, window_bounds = array<i64: 1, 32>}, {pipeline_mode = #tpu.pipeline_mode<synchronous>, transform_indices = @transform_2, window_bounds = array<i64: 1, 32>}, {pipeline_mode = #tpu.pipeline_mode<synchronous>, transform_indices = @transform_3, window_bounds = array<i64: 32, 96>}, {pipeline_mode = #tpu.pipeline_mode<synchronous>, transform_indices = @transform_4, window_bounds = array<i64: 1, 96>}, {transform_indices = @transform_5, window_bounds = array<i64: 16, 32>}, {transform_indices = @transform_6, window_bounds = array<i64: 16, 32>}, {transform_indices = @transform_7, window_bounds = array<i64: 16, 32>}]} {
    %c0 = arith.constant 0 : index
    %c0_0 = arith.constant 0 : index
    %0 = vector.load %arg1[%c0, %c0_0] : memref<16x32xf32, #tpu.memory_space<vmem>>, vector<16x32xf32>
    %c0_1 = arith.constant 0 : index
    %c0_2 = arith.constant 0 : index
    %1 = vector.load %arg2[%c0_1, %c0_2] : memref<1x32xf32, #tpu.memory_space<vmem>>, vector<1x32xf32>
    %2 = vector.shape_cast %1 : vector<1x32xf32> to vector<32xf32>
    %c0_3 = arith.constant 0 : index
    %c0_4 = arith.constant 0 : index
    %3 = vector.load %arg3[%c0_3, %c0_4] : memref<1x32xf32, #tpu.memory_space<vmem>>, vector<1x32xf32>
    %4 = vector.shape_cast %3 : vector<1x32xf32> to vector<32xf32>
    %cst = arith.constant dense<0.000000e+00> : vector<16xf32>
    %5 = vector.multi_reduction <add>, %0, %cst [1] : vector<16x32xf32> to vector<16xf32>
    %6 = vector.shape_cast %5 : vector<16xf32> to vector<16x1xf32>
    %cst_5 = arith.constant 3.200000e+01 : f32
    %7 = vector.broadcast %cst_5 : f32 to vector<16x1xf32>
    %8 = arith.divf %6, %7 : vector<16x1xf32>
    %9 = vector.broadcast %8 : vector<16x1xf32> to vector<16x32xf32>
    %10 = arith.subf %0, %9 : vector<16x32xf32>
    %11 = arith.mulf %10, %10 : vector<16x32xf32>
    %cst_6 = arith.constant dense<0.000000e+00> : vector<16xf32>
    %12 = vector.multi_reduction <add>, %11, %cst_6 [1] : vector<16x32xf32> to vector<16xf32>
    %13 = vector.shape_cast %12 : vector<16xf32> to vector<16x1xf32>
    %cst_7 = arith.constant 3.200000e+01 : f32
    %14 = vector.broadcast %cst_7 : f32 to vector<16x1xf32>
    %15 = arith.divf %13, %14 : vector<16x1xf32>
    %16 = vector.broadcast %8 : vector<16x1xf32> to vector<16x32xf32>
    %17 = arith.subf %0, %16 : vector<16x32xf32>
    %cst_8 = arith.constant 9.99999974E-6 : f32
    %18 = vector.broadcast %cst_8 : f32 to vector<16x1xf32>
    %19 = arith.addf %15, %18 : vector<16x1xf32>
    %20 = math.rsqrt %19 : vector<16x1xf32>
    %21 = vector.broadcast %20 : vector<16x1xf32> to vector<16x32xf32>
    %22 = arith.mulf %17, %21 : vector<16x32xf32>
    %23 = vector.shape_cast %2 : vector<32xf32> to vector<1x32xf32>
    %24 = vector.broadcast %23 : vector<1x32xf32> to vector<16x32xf32>
    %25 = arith.mulf %22, %24 : vector<16x32xf32>
    %26 = vector.shape_cast %4 : vector<32xf32> to vector<1x32xf32>
    %27 = vector.broadcast %26 : vector<1x32xf32> to vector<16x32xf32>
    %28 = arith.addf %25, %27 : vector<16x32xf32>
    %c0_9 = arith.constant 0 : index
    %c0_10 = arith.constant 0 : index
    %29 = vector.load %arg4[%c0_9, %c0_10] : memref<32x96xf32, #tpu.memory_space<vmem>>, vector<32x96xf32>
    %cst_11 = arith.constant dense<0.000000e+00> : vector<16x96xf32>
    %30 = tpu.matmul %28, %29, %cst_11 {dimension_numbers = #tpu.dot_dimension_numbers<[1], [0], [0], [1], [0, 0, 1, 1], [], []>} : vector<16x32xf32>, vector<32x96xf32>, vector<16x96xf32> -> vector<16x96xf32>
    %c0_12 = arith.constant 0 : index
    %c0_13 = arith.constant 0 : index
    %31 = vector.load %arg5[%c0_12, %c0_13] : memref<1x96xf32, #tpu.memory_space<vmem>>, vector<1x96xf32>
    %32 = vector.shape_cast %31 : vector<1x96xf32> to vector<96xf32>
    %33 = vector.shape_cast %32 : vector<96xf32> to vector<1x96xf32>
    %34 = vector.broadcast %33 : vector<1x96xf32> to vector<16x96xf32>
    %35 = arith.addf %30, %34 : vector<16x96xf32>
    %36 = vector.extract_strided_slice %35 {offsets = [0, 0], sizes = [16, 32], strides = [1, 1]} : vector<16x96xf32> to vector<16x32xf32>
    %c0_14 = arith.constant 0 : index
    %c0_15 = arith.constant 0 : index
    %37 = vector.load %arg6[%c0_14, %c0_15] : memref<16x32xf32, #tpu.memory_space<vmem>>, vector<16x32xf32>
    tpu.vector_store %arg6[%c0_14, %c0_15], %36 {strides = array<i32>} : memref<16x32xf32, #tpu.memory_space<vmem>>, vector<16x32xf32>,
    %38 = vector.extract_strided_slice %35 {offsets = [0, 32], sizes = [16, 32], strides = [1, 1]} : vector<16x96xf32> to vector<16x32xf32>
    %c0_16 = arith.constant 0 : index
    %c0_17 = arith.constant 0 : index
    %39 = vector.load %arg7[%c0_16, %c0_17] : memref<16x32xf32, #tpu.memory_space<vmem>>, vector<16x32xf32>
    tpu.vector_store %arg7[%c0_16, %c0_17], %38 {strides = array<i32>} : memref<16x32xf32, #tpu.memory_space<vmem>>, vector<16x32xf32>,
    %40 = vector.extract_strided_slice %35 {offsets = [0, 64], sizes = [16, 32], strides = [1, 1]} : vector<16x96xf32> to vector<16x32xf32>
    %c0_18 = arith.constant 0 : index
    %c0_19 = arith.constant 0 : index
    %41 = vector.load %arg8[%c0_18, %c0_19] : memref<16x32xf32, #tpu.memory_space<vmem>>, vector<16x32xf32>
    tpu.vector_store %arg8[%c0_18, %c0_19], %40 {strides = array<i32>} : memref<16x32xf32, #tpu.memory_space<vmem>>, vector<16x32xf32>,
    return
  }
  func.func @transform_0(%arg0: i32) -> (i32, i32) {
    %c0_i32 = arith.constant 0 : i32
    %c0_i32_0 = arith.constant 0 : i32
    return %arg0, %c0_i32 : i32, i32
  }
  func.func @transform_1(%arg0: i32) -> (i32, i32) {
    %c0_i32 = arith.constant 0 : i32
    %c0_i32_0 = arith.constant 0 : i32
    %c0_i32_1 = arith.constant 0 : i32
    return %c0_i32, %c0_i32_0 : i32, i32
  }
  func.func @transform_2(%arg0: i32) -> (i32, i32) {
    %c0_i32 = arith.constant 0 : i32
    %c0_i32_0 = arith.constant 0 : i32
    %c0_i32_1 = arith.constant 0 : i32
    return %c0_i32, %c0_i32_0 : i32, i32
  }
  func.func @transform_3(%arg0: i32) -> (i32, i32) {
    %c0_i32 = arith.constant 0 : i32
    %c0_i32_0 = arith.constant 0 : i32
    %c0_i32_1 = arith.constant 0 : i32
    return %c0_i32, %c0_i32_0 : i32, i32
  }
  func.func @transform_4(%arg0: i32) -> (i32, i32) {
    %c0_i32 = arith.constant 0 : i32
    %c0_i32_0 = arith.constant 0 : i32
    %c0_i32_1 = arith.constant 0 : i32
    return %c0_i32, %c0_i32_0 : i32, i32
  }
  func.func @transform_5(%arg0: i32) -> (i32, i32) {
    %c0_i32 = arith.constant 0 : i32
    %c0_i32_0 = arith.constant 0 : i32
    return %arg0, %c0_i32 : i32, i32
  }
  func.func @transform_6(%arg0: i32) -> (i32, i32) {
    %c0_i32 = arith.constant 0 : i32
    %c0_i32_0 = arith.constant 0 : i32
    return %arg0, %c0_i32 : i32, i32
  }
  func.func @transform_7(%arg0: i32) -> (i32, i32) {
    %c0_i32 = arith.constant 0 : i32
    %c0_i32_0 = arith.constant 0 : i32
    return %arg0, %c0_i32 : i32, i32
  }
}

</mosaic_0001>

<llo_original>
// kernel: tpu_custom_call.1
$region0: #{tpu_custom_call.1}
  #allocation0 [shape = 'u32[]', space=smem, size = 0x4, offset = 0x4, fixed_abs, tag = 'smem constant byte address 0x4 - core index']
  #allocation1 [shape = 'u32[72,128]{1,0:T(1,128)}', space=vmem, size = 0x9000, scoped, tag = 'internal scratch']
  %s0 = inlined_call_operand.hbm [shape: f32[16,32], index: 0, kind: input, shape index: {}]
  %s1 = inlined_call_operand.hbm [shape: f32[1,32], index: 1, kind: input, shape index: {}]
  %s2 = inlined_call_operand.vmem [shape: f32[1,32], index: 2, kind: input, shape index: {}]
  %s3 = inlined_call_operand.hbm [shape: f32[32,96], index: 3, kind: input, shape index: {}]
  %s4 = inlined_call_operand.vmem [shape: f32[1,96], index: 4, kind: input, shape index: {}]
  %s5 = inlined_call_operand.hbm [shape: f32[16,32], index: 5, kind: output, shape index: {0}]
  %s6 = inlined_call_operand.hbm [shape: f32[16,32], index: 6, kind: output, shape index: {1}]
  %s7 = inlined_call_operand.hbm [shape: f32[16,32], index: 7, kind: output, shape index: {2}]
  %8 = xla_tuple %s5, %s6, %s7
  %s9 = sld [smem:[#allocation0]]
  $region58: #{tpu_custom_call.1} parent=0
    _
  %s11 = ssub.s32 1, %s9
  %s12 = scalar_select 0, %s11, %s9
  $region1: #{tpu_custom_call.1} parent=0
    #allocation2 [shape = 'u8[8192]{0}', space=vmem, size = 0x2000, scoped, tag = 'input window, operand 0, single buffered']
    #allocation3 [shape = 's32[1]{0}', space=sflag, size = 0x4, scoped, tag = 'scoped memory for tpu_custom_call.1']
    #allocation4 [shape = 's32[1]{0}', space=sflag, size = 0x4, scoped, tag = 'scoped memory for tpu_custom_call.1']
    #allocation5 [shape = 'u8[512]{0}', space=vmem, size = 0x400, scoped, tag = 'input window, operand 1, single buffered']
    #allocation6 [shape = 's32[1]{0}', space=sflag, size = 0x4, scoped, tag = 'scoped memory for tpu_custom_call.1']
    #allocation7 [shape = 'u8[16384]{0}', space=vmem, size = 0x4000, scoped, tag = 'input window, operand 3, single buffered']
    #allocation8 [shape = 'u8[8192]{0}', space=vmem, size = 0x2000, scoped, tag = 'output window, operand 0, single buffered']
    #allocation9 [shape = 'u8[8192]{0}', space=vmem, size = 0x2000, scoped, tag = 'output window, operand 1, single buffered']
    #allocation10 [shape = 's32[1]{0}', space=sflag, size = 0x4, scoped, tag = 'scoped memory for tpu_custom_call.1']
    #allocation11 [shape = 'u8[8192]{0}', space=vmem, size = 0x2000, scoped, tag = 'output window, operand 2, single buffered']
    %13 = vsyncpa [#allocation3], 0
    %14 = vsyncpa [#allocation6], 0
    %15 = vsyncpa [#allocation4], 0
    %16 = vsyncpa [#allocation10], 0
    // Predicated region
    $region2: #{tpu_custom_call.1} parent=1 // pred_check
      _
    $region3: #{tpu_custom_call.1} parent=1 // pred_check_branch
      %18 = sbr.rel (0) target = $region5
    $region4: #{tpu_custom_call.1} parent=1 // pred_region
      %20 = vsyncadd [#allocation3], 0
      %s21 = sshll.u32 %s0, 4
      %s22 = int_to_ptr.hbm [resolvable:$true] %s21
      %s23 = sshll.u32 [#allocation2], 4
      %s24 = int_to_ptr.vmem [resolvable:$true] %s23
      %29 = dma.hbm_to_vmem [thread:$0]  %s22, 256, %s24, [#allocation3], 128, 128, 8
    $region5: #{tpu_custom_call.1} parent=1 // pred_fallthru
      _
    // Predicated region
    $region6: #{tpu_custom_call.1} parent=1 // pred_check
      _
    $region7: #{tpu_custom_call.1} parent=1 // pred_check_branch
      %31 = sbr.rel (0) target = $region9
    $region8: #{tpu_custom_call.1} parent=1 // pred_region
      %33 = vsyncadd [#allocation6], 0
      %s35 = sshll.u32 %s1, 4
      %s36 = int_to_ptr.hbm [resolvable:$true] %s35
      %s37 = sshll.u32 [#allocation5], 4
      %s38 = int_to_ptr.vmem [resolvable:$true] %s37
      %40 = dma.hbm_to_vmem [thread:$0]  %s36, 16, %s38, [#allocation6]
    $region9: #{tpu_custom_call.1} parent=1 // pred_fallthru
      _
    // Predicated region
    $region10: #{tpu_custom_call.1} parent=1 // pred_check
      _
    $region11: #{tpu_custom_call.1} parent=1 // pred_check_branch
      %42 = sbr.rel (0) target = $region13
    $region12: #{tpu_custom_call.1} parent=1 // pred_region
      _
    $region13: #{tpu_custom_call.1} parent=1 // pred_fallthru
      _
    // Predicated region
    $region14: #{tpu_custom_call.1} parent=1 // pred_check
      _
    $region15: #{tpu_custom_call.1} parent=1 // pred_check_branch
      %44 = sbr.rel (0) target = $region17
    $region16: #{tpu_custom_call.1} parent=1 // pred_region
      %46 = vsyncadd [#allocation6], 0
      %s47 = sshll.u32 %s3, 4
      %s48 = int_to_ptr.hbm [resolvable:$true] %s47
      %s49 = sshll.u32 [#allocation7], 4
      %s50 = int_to_ptr.vmem [resolvable:$true] %s49
      %55 = dma.hbm_to_vmem [thread:$0]  %s48, 512, %s50, [#allocation6], 128, 128, 8
    $region17: #{tpu_custom_call.1} parent=1 // pred_fallthru
      _
    // Predicated region
    $region18: #{tpu_custom_call.1} parent=1 // pred_check
      _
    $region19: #{tpu_custom_call.1} parent=1 // pred_check_branch
      %57 = sbr.rel (0) target = $region21
    $region20: #{tpu_custom_call.1} parent=1 // pred_region
      _
    $region21: #{tpu_custom_call.1} parent=1 // pred_fallthru
      _
    // Predicated region
    $region22: #{tpu_custom_call.1} parent=1 // pred_check
      _
    $region23: #{tpu_custom_call.1} parent=1 // pred_check_branch
      %59 = sbr.rel (0) target = $region25
    $region24: #{tpu_custom_call.1} parent=1 // pred_region
      %61 = dma.done [#allocation3], 256
    $region25: #{tpu_custom_call.1} parent=1 // pred_fallthru
      _
    // Predicated region
    $region26: #{tpu_custom_call.1} parent=1 // pred_check
      _
    $region27: #{tpu_custom_call.1} parent=1 // pred_check_branch
      %63 = sbr.rel (0) target = $region29
    $region28: #{tpu_custom_call.1} parent=1 // pred_region
      %65 = dma.done [#allocation6], 16
    $region29: #{tpu_custom_call.1} parent=1 // pred_fallthru
      _
    // Predicated region
    $region30: #{tpu_custom_call.1} parent=1 // pred_check
      _
    $region31: #{tpu_custom_call.1} parent=1 // pred_check_branch
      %67 = sbr.rel (0) target = $region33
    $region32: #{tpu_custom_call.1} parent=1 // pred_region
      %69 = dma.done [#allocation6], 512
    $region33: #{tpu_custom_call.1} parent=1 // pred_fallthru
      _
    %v70 = vld [vmem:[#allocation2] sm:$0xff]
    %v71 = vld [vmem:[#allocation2 + $0x8] sm:$0xff]
    %v72 = vld [vmem:[#allocation5] sm:$0x1]
    %v73 = vld [vmem:[%s2] sm:$0x1]
    %vm74 = vcmask 261120
    %v75 = vsel %vm74, %v70, 0.0
    %76 = vadd.xlane.f32.xlu0 %v75
    %v77 = vpop.xlane.xlu0 %76
    %v78 = vsel %vm74, %v71, 0.0
    %79 = vadd.xlane.f32.xlu0 %v78
    %v80 = vpop.xlane.xlu0 %79
    %v81 = vrcp.pop 32.0
    %v82 = vmul.f32 32.0, %v81
    %v83 = vsub.f32 1.0, %v82
    %v84 = vmul.f32 %v81, %v83
    %v85 = vadd.f32 %v81, %v84
    %vm86 = vweird.f32 %v81
    %v87 = vsel %vm86, %v81, %v85
    %v88 = vmul.f32 %v77, %v87
    %v89 = vmul.f32 %v80, %v87
    %v90 = vsub.f32 %v70, %v88
    %v91 = vsub.f32 %v71, %v89
    %v92 = vmul.f32 %v90, %v90
    %v93 = vmul.f32 %v91, %v91
    %v94 = vsel %vm74, %v92, 0.0
    %95 = vadd.xlane.f32.xlu0 %v94
    %v96 = vpop.xlane.xlu0 %95
    %v97 = vsel %vm74, %v93, 0.0
    %98 = vadd.xlane.f32.xlu0 %v97
    %v99 = vpop.xlane.xlu0 %98
    %v100 = vmul.f32 %v96, %v87
    %v101 = vmul.f32 %v99, %v87
    %v102 = vadd.f32 %v100, 1e-05
    %v103 = vadd.f32 %v101, 1e-05
    %v104 = vrsqrt.pop %v102
    %v105 = vmul.f32 %v104, %v102
    %v106 = vmul.f32 %v105, %v104
    %v107 = vmul.f32 0.5, %v106
    %v108 = vsub.f32 1.5, %v107
    %v109 = vmul.f32 %v104, %v108
    %vm110 = vweird.f32 %v102
    %vm111 = vweird.f32 %v104
    %vm112 = vmor %vm110, %vm111
    %v113 = vsel %vm112, %v104, %v109
    %v114 = vrsqrt.pop %v103
    %v115 = vmul.f32 %v114, %v103
    %v116 = vmul.f32 %v115, %v114
    %v117 = vmul.f32 0.5, %v116
    %v118 = vsub.f32 1.5, %v117
    %v119 = vmul.f32 %v114, %v118
    %vm120 = vweird.f32 %v103
    %vm121 = vweird.f32 %v114
    %vm122 = vmor %vm120, %vm121
    %v123 = vsel %vm122, %v114, %v119
    %v124 = vmul.f32 %v90, %v113
    %v125 = vmul.f32 %v91, %v123
    %v127 = vperm.slane %v72, 0
    %v129 = vmul.f32 %v124, %v127
    %v130 = vmul.f32 %v125, %v127
    %v132 = vperm.slane %v73, 0
    %v134 = vadd.f32 %v129, %v132
    %v135 = vadd.f32 %v130, %v132
    %v136 = vld [vmem:[#allocation7] sm:$0xff]
    %v137 = vld [vmem:[#allocation7 + $0x8] sm:$0xff]
    %v138 = vld [vmem:[#allocation7 + $0x10] sm:$0xff]
    %v139 = vld [vmem:[#allocation7 + $0x18] sm:$0xff]
    %v140 = vld [vmem:[%s4] sm:$0x1]
    %v142 = vperm.slane %v140, 0
    %v145 = vsel %vm74, %v134, 0
    %v148 = vsel %vm74, %v135, 0
    %150 = vmatpush.msra.mxu0 0.0
    %151 = vmatpush.msra.mxu0 0.0
    %152 = vmatpush.msra.mxu0 0.0
    %153 = vmatpush.msra.mxu0 0.0
    %154 = vmatpush.msra.mxu0 0.0
    %155 = vmatpush.msra.mxu0 0.0
    %156 = vmatpush.msra.mxu0 0.0
    %157 = vmatpush.msra.mxu0 0.0
    %158 = vmatpush.msra.mxu0 0.0
    %159 = vmatpush.msra.mxu0 0.0
    %160 = vmatpush.msra.mxu0 0.0
    %161 = vmatpush.msra.mxu0 0.0
    %162 = vmatpush.msra.mxu0 %v139
    %163 = vmatpush.msra.mxu0 %v138
    %164 = vmatpush.msra.mxu0 %v137
    %165 = vmatpush.msra.mxu0 %v136
    %166 = vmatmul.f32.gmra.mxu0 %v145
    %v167 = vpop.f32.mrf.mxu0
    %v168 = vadd.f32 %v142, %v167
    %169 = vmatmul.f32.gmra.mxu0 %v148
    %v170 = vpop.f32.mrf.mxu0
    %v171 = vadd.f32 %v142, %v170
    %172 = vdwg.mxu0
    %173 = vst.msk [vmem:[#allocation8] sm:$0xff] %vm74, %v168
    %174 = vst.msk [vmem:[#allocation8 + $0x8] sm:$0xff] %vm74, %v171
    %177 = vrot.lane.b32.xlu0 %v168, 96
    %v178 = vpop.permute.xlu0 %177
    %179 = vrot.lane.b32.xlu0 %v171, 96
    %v180 = vpop.permute.xlu0 %179
    %183 = vst.msk [vmem:[#allocation9] sm:$0xff] %vm74, %v178
    %184 = vst.msk [vmem:[#allocation9 + $0x8] sm:$0xff] %vm74, %v180
    %185 = vrot.lane.b32.xlu0 %v168, 64
    %v186 = vpop.permute.xlu0 %185
    %187 = vrot.lane.b32.xlu0 %v171, 64
    %v188 = vpop.permute.xlu0 %187
    %191 = vst.msk [vmem:[#allocation11] sm:$0xff] %vm74, %v186
    %192 = vst.msk [vmem:[#allocation11 + $0x8] sm:$0xff] %vm74, %v188
    // Predicated region
    $region34: #{tpu_custom_call.1} parent=1 // pred_check
      _
    $region35: #{tpu_custom_call.1} parent=1 // pred_check_branch
      %194 = sbr.rel (0) target = $region37
    $region36: #{tpu_custom_call.1} parent=1 // pred_region
      %196 = vsyncadd [#allocation4], 0
      %s197 = sshll.u32 [#allocation8], 4
      %s198 = int_to_ptr.vmem [resolvable:$true] %s197
      %s199 = sshll.u32 %s5, 4
      %s200 = int_to_ptr.hbm [resolvable:$true] %s199
      %205 = dma.vmem_to_hbm [thread:$0]  %s198, 256, %s200, [#allocation4], 128, 128, 8
    $region37: #{tpu_custom_call.1} parent=1 // pred_fallthru
      _
    // Predicated region
    $region38: #{tpu_custom_call.1} parent=1 // pred_check
      _
    $region39: #{tpu_custom_call.1} parent=1 // pred_check_branch
      %207 = sbr.rel (0) target = $region41
    $region40: #{tpu_custom_call.1} parent=1 // pred_region
      %209 = vsyncadd [#allocation10], 0
      %s210 = sshll.u32 [#allocation9], 4
      %s211 = int_to_ptr.vmem [resolvable:$true] %s210
      %s212 = sshll.u32 %s6, 4
      %s213 = int_to_ptr.hbm [resolvable:$true] %s212
      %218 = dma.vmem_to_hbm [thread:$0]  %s211, 256, %s213, [#allocation10], 128, 128, 8
    $region41: #{tpu_custom_call.1} parent=1 // pred_fallthru
      _
    // Predicated region
    $region42: #{tpu_custom_call.1} parent=1 // pred_check
      _
    $region43: #{tpu_custom_call.1} parent=1 // pred_check_branch
      %220 = sbr.rel (0) target = $region45
    $region44: #{tpu_custom_call.1} parent=1 // pred_region
      %222 = vsyncadd [#allocation10], 0
      %s223 = sshll.u32 [#allocation11], 4
      %s224 = int_to_ptr.vmem [resolvable:$true] %s223
      %s225 = sshll.u32 %s7, 4
      %s226 = int_to_ptr.hbm [resolvable:$true] %s225
      %231 = dma.vmem_to_hbm [thread:$0]  %s224, 256, %s226, [#allocation10], 128, 128, 8
    $region45: #{tpu_custom_call.1} parent=1 // pred_fallthru
      _
    // Predicated region
    $region46: #{tpu_custom_call.1} parent=1 // pred_check
      _
    $region47: #{tpu_custom_call.1} parent=1 // pred_check_branch
      %233 = sbr.rel (0) target = $region49
    $region48: #{tpu_custom_call.1} parent=1 // pred_region
      %235 = dma.done [#allocation4], 256
    $region49: #{tpu_custom_call.1} parent=1 // pred_fallthru
      _
    // Predicated region
    $region50: #{tpu_custom_call.1} parent=1 // pred_check
      _
    $region51: #{tpu_custom_call.1} parent=1 // pred_check_branch
      %237 = sbr.rel (0) target = $region53
    $region52: #{tpu_custom_call.1} parent=1 // pred_region
      %239 = dma.done [#allocation10], 256
    $region53: #{tpu_custom_call.1} parent=1 // pred_fallthru
      _
    // Predicated region
    $region54: #{tpu_custom_call.1} parent=1 // pred_check
      _
    $region55: #{tpu_custom_call.1} parent=1 // pred_check_branch
      %241 = sbr.rel (0) target = $region57
    $region56: #{tpu_custom_call.1} parent=1 // pred_region
      %243 = dma.done [#allocation10], 256
    $region57: #{tpu_custom_call.1} parent=1 // pred_fallthru
      _
    %244 = vsyncpa [#allocation3], 1
    %245 = vsyncpa [#allocation6], 1
    %246 = vsyncpa [#allocation4], 1
    %247 = vsyncpa [#allocation10], 1

</llo_original>
